<compile_context>
chip_gen: v7x
topology: tpu7x:2x2x1
jax: 0.10.0
libtpu: 0.0.40
codegen_flags: <defaults>
</compile_context>

<pallas_src>
import functools
import math

import jax
import jax.numpy as jnp
from jax import lax
from jax.experimental import pallas as pl
from jax.experimental.pallas import tpu as pltpu


def _default_vmem_limit_bytes():
    # Generation-aware: ~3/4 of physical VMEM (v5e/v6e: 128 MiB, v7x: 64 MiB).
    try:
        cap = getattr(pltpu.get_tpu_info(), "vmem_capacity_bytes", None)
        if cap:
            return int(cap) * 3 // 4
    except Exception:
        pass
    return 48 * 1024 * 1024


VMEM_LIMIT_BYTES = _default_vmem_limit_bytes()


def _pick_divisor_tile(total, target, quantum=8):
    """Largest multiple-of-`quantum` divisor of `total` that is <= target."""
    if total <= target:
        return total
    t = (min(target, total) // quantum) * quantum
    while t >= quantum:
        if total % t == 0:
            return t
        t -= quantum
    return total


# ----------------------------------------------------------------------------
# Projection kernel: y = x @ w + b, tiled over (M, Dout)
# ----------------------------------------------------------------------------
def _linear_kernel(x_ref, w_ref, b_ref, o_ref):
    acc = jnp.dot(x_ref[...].astype(jnp.bfloat16),
                  w_ref[...].astype(jnp.bfloat16),
                  preferred_element_type=jnp.float32)
    o_ref[...] = (acc + b_ref[...]).astype(o_ref.dtype)


def linear(x, w, b, *, tm_target=512, tn_target=512):
    """x: (M, Din), w: (Din, Dout), b: (Dout,) -> (M, Dout)."""
    M, Din = x.shape
    Dout = w.shape[1]
    tm = M if M <= tm_target else tm_target        # multiple of 8 (ragged edge ok)
    tn = Dout if Dout <= tn_target else tn_target  # multiple of 128 (ragged ok)
    grid = (pl.cdiv(M, tm), pl.cdiv(Dout, tn))

    flops = 2 * M * Din * Dout
    bytes_accessed = 4 * (M * Din + Din * Dout + Dout + M * Dout)

    return pl.pallas_call(
        _linear_kernel,
        out_shape=jax.ShapeDtypeStruct((M, Dout), x.dtype),
        grid_spec=pltpu.PrefetchScalarGridSpec(
            num_scalar_prefetch=0,
            grid=grid,
            in_specs=[
                pl.BlockSpec((tm, Din), lambda i, j: (i, 0)),
                pl.BlockSpec((Din, tn), lambda i, j: (0, j)),
                pl.BlockSpec((1, tn), lambda i, j: (0, j)),
            ],
            out_specs=pl.BlockSpec((tm, tn), lambda i, j: (i, j)),
        ),
        compiler_params=pltpu.CompilerParams(
            dimension_semantics=("parallel", "parallel"),
            vmem_limit_bytes=VMEM_LIMIT_BYTES,
        ),
        cost_estimate=pl.CostEstimate(
            flops=flops, transcendentals=0, bytes_accessed=bytes_accessed),
    )(x, w, b.reshape(1, Dout))


# ----------------------------------------------------------------------------
# Flash-style attention kernel (online softmax over tiled KV)
# ----------------------------------------------------------------------------
def _flash_attn_kernel(q_ref, k_ref, v_ref, o_ref, m_ref, l_ref, acc_ref,
                       *, n_heads, d_k):
    kv = pl.program_id(2)

    @pl.when(kv == 0)
    def _():
        m_ref[...] = jnp.full_like(m_ref, -jnp.inf)
        l_ref[...] = jnp.zeros_like(l_ref)
        acc_ref[...] = jnp.zeros_like(acc_ref)

    # Static unroll over heads; each head's scores die into per-head scratch.
    for h in range(n_heads):
        sl = pl.ds(h * d_k, d_k)
        q = q_ref[0, :, sl].astype(jnp.bfloat16)   # (tq, dk); 1/sqrt(dk) folded into w_q
        k = k_ref[0, :, sl].astype(jnp.bfloat16)   # (tk, dk)
        v = v_ref[0, :, sl].astype(jnp.bfloat16)   # (tk, dk)

        # QK^T without a transpose: contract last dims, bf16 MXU, f32 acc.
        s = lax.dot_general(
            q, k, dimension_numbers=(((1,), (1,)), ((), ())),
            preferred_element_type=jnp.float32)    # (tq, tk)

        m_prev = m_ref[h]                                           # (tq, 1)
        m_new = jnp.maximum(m_prev, jnp.max(s, axis=-1, keepdims=True))
        alpha = jnp.exp(m_prev - m_new)
        p = jnp.exp(s - m_new)
        l_ref[h] = alpha * l_ref[h] + jnp.sum(p, axis=-1, keepdims=True)
        acc_ref[h] = alpha * acc_ref[h] + jnp.dot(
            p.astype(jnp.bfloat16), v, preferred_element_type=jnp.float32)
        m_ref[h] = m_new

    @pl.when(kv == pl.num_programs(2) - 1)
    def _():
        # One lane-dense (tq, D) store instead of per-head d_k-wide masked stores.
        outs = [acc_ref[h] * pl.reciprocal(l_ref[h], approx=True)
                for h in range(n_heads)]
        o_ref[0] = jnp.concatenate(outs, axis=-1).astype(o_ref.dtype)


def flash_attention(q_arr, k_arr, v_arr, *, q_col, k_col, v_col, n_heads, d_k,
                    d_model, tq_target=256, tk_target=512):
    """Flash MHA over head-interleaved (B, S, *) arrays.

    q_arr/k_arr/v_arr may all be the same fused (B, S, 3*D) qkv slab; the
    *_col arguments select the D-wide column block (0 for separate arrays,
    0/1/2 for the fused slab) so no extra HBM copies are needed.
    """
    B, Sq = q_arr.shape[0], q_arr.shape[1]
    Sk = k_arr.shape[1]
    assert v_arr.shape[1] == Sk, "Sk != Sv is not supported"
    D = d_model

    tq = _pick_divisor_tile(Sq, tq_target, 8)
    tk = _pick_divisor_tile(Sk, tk_target, 8)
    grid = (B, Sq // tq, Sk // tk)

    kernel = functools.partial(_flash_attn_kernel, n_heads=n_heads, d_k=d_k)

    flops = 2 * 2 * B * n_heads * Sq * Sk * d_k            # QK^T + PV
    transcendentals = B * n_heads * Sq * Sk                 # exp
    bytes_accessed = 4 * (2 * B * Sq * D + 2 * B * Sk * D)

    return pl.pallas_call(
        kernel,
        out_shape=jax.ShapeDtypeStruct((B, Sq, D), q_arr.dtype),
        grid_spec=pltpu.PrefetchScalarGridSpec(
            num_scalar_prefetch=0,
            grid=grid,
            in_specs=[
                pl.BlockSpec((1, tq, D), lambda b, i, j, c=q_col: (b, i, c)),
                pl.BlockSpec((1, tk, D), lambda b, i, j, c=k_col: (b, j, c)),
                pl.BlockSpec((1, tk, D), lambda b, i, j, c=v_col: (b, j, c)),
            ],
            out_specs=pl.BlockSpec((1, tq, D), lambda b, i, j: (b, i, 0)),
            scratch_shapes=[
                pltpu.VMEM((n_heads, tq, 1), jnp.float32),    # running max m
                pltpu.VMEM((n_heads, tq, 1), jnp.float32),    # running sum l
                pltpu.VMEM((n_heads, tq, d_k), jnp.float32),  # output accumulator
            ],
        ),
        compiler_params=pltpu.CompilerParams(
            dimension_semantics=("parallel", "parallel", "arbitrary"),
            vmem_limit_bytes=VMEM_LIMIT_BYTES,
        ),
        cost_estimate=pl.CostEstimate(
            flops=flops, transcendentals=transcendentals,
            bytes_accessed=bytes_accessed),
    )(q_arr, k_arr, v_arr)


# ----------------------------------------------------------------------------
# Module wrapper
# ----------------------------------------------------------------------------
class MultiHeadAttentionPallas:
    """Eval-mode equivalent of the PyTorch MultiHeadAttention module."""

    def __init__(self, d_model, n_heads, key, attn_tq=256, attn_tk=512):
        assert d_model % n_heads == 0
        self.d_model = d_model
        self.n_heads = n_heads
        self.d_k = d_model // n_heads
        self.scale = math.sqrt(self.d_k)
        self.attn_tq = attn_tq
        self.attn_tk = attn_tk

        keys = jax.random.split(key, 8)
        bound = 1.0 / math.sqrt(d_model)  # torch nn.Linear default init bound

        def init_linear(kw, kb):
            w = jax.random.uniform(kw, (d_model, d_model), jnp.float32, -bound, bound)
            b = jax.random.uniform(kb, (d_model,), jnp.float32, -bound, bound)
            return w, b

        self.w_q, self.b_q = init_linear(keys[0], keys[1])
        self.w_k, self.b_k = init_linear(keys[2], keys[3])
        self.w_v, self.b_v = init_linear(keys[4], keys[5])
        self.w_o, self.b_o = init_linear(keys[6], keys[7])

        # Fold 1/sqrt(d_k) into the query projection weights (free at init).
        inv_scale = 1.0 / self.scale
        self.w_q_s = self.w_q * inv_scale
        self.b_q_s = self.b_q * inv_scale
        # Fused QKV weights: one (B*S, D) x (D, 3D) projection for self-attention.
        self.w_qkv = jnp.concatenate([self.w_q_s, self.w_k, self.w_v], axis=1)
        self.b_qkv = jnp.concatenate([self.b_q_s, self.b_k, self.b_v])

    def __call__(self, query, key, value, mask=None):
        if mask is not None:
            # TODO(synk): mask path not implemented (module used with mask=None).
            raise NotImplementedError("attention mask is not supported")
        B, Sq, D = query.shape
        Sk = key.shape[1]
        Sv = value.shape[1]
        H, Dk = self.n_heads, self.d_k

        fused = (query is key) and (key is value) and (D % 128 == 0)
        if fused:
            # Self-attention fast path: no jnp.stack / extra HBM copies.
            qkv = linear(query.reshape(B * Sq, D), self.w_qkv, self.b_qkv)
            qkv = qkv.reshape(B, Sq, 3 * D)
            o = flash_attention(qkv, qkv, qkv, q_col=0, k_col=1, v_col=2,
                                n_heads=H, d_k=Dk, d_model=D,
                                tq_target=self.attn_tq, tk_target=self.attn_tk)
        else:
            q = linear(query.reshape(B * Sq, D), self.w_q_s, self.b_q_s).reshape(B, Sq, D)
            k = linear(key.reshape(B * Sk, D), self.w_k, self.b_k).reshape(B, Sk, D)
            v = linear(value.reshape(B * Sv, D), self.w_v, self.b_v).reshape(B, Sv, D)
            o = flash_attention(q, k, v, q_col=0, k_col=0, v_col=0,
                                n_heads=H, d_k=Dk, d_model=D,
                                tq_target=self.attn_tq, tk_target=self.attn_tk)

        # Output projection (dropout is the eval-mode identity).
        out = linear(o.reshape(B * Sq, D), self.w_o, self.b_o)
        return out.reshape(B, Sq, D)


# ----------------------------------------------------------------------------
# Reference (pure JAX) for sanity check
# ----------------------------------------------------------------------------
def reference_forward(mha, query, key, value):
    B, Sq, D = query.shape
    Sk = key.shape[1]
    H, Dk = mha.n_heads, mha.d_k
    q = (query @ mha.w_q + mha.b_q).reshape(B, Sq, H, Dk).transpose(0, 2, 1, 3)
    k = (key @ mha.w_k + mha.b_k).reshape(B, Sk, H, Dk).transpose(0, 2, 1, 3)
    v = (value @ mha.w_v + mha.b_v).reshape(B, Sk, H, Dk).transpose(0, 2, 1, 3)
    scores = jnp.einsum("bhqd,bhkd->bhqk", q, k) / mha.scale
    p = jax.nn.softmax(scores, axis=-1)
    o = jnp.einsum("bhqk,bhkd->bhqd", p, v).transpose(0, 2, 1, 3).reshape(B, Sq, D)
    return o @ mha.w_o + mha.b_o


if __name__ == "__main__":
    root = jax.random.PRNGKey(0)
    k_params, k_x, k_q, k_k, k_v = jax.random.split(root, 5)

    batch, seq, d_model, n_heads = 2, 32, 128, 4
    # Small attention tiles so the online softmax runs over multiple KV steps.
    mha = MultiHeadAttentionPallas(d_model, n_heads, k_params, attn_tq=16, attn_tk=16)

    # Self-attention (fused (D, 3D) projection + column-block qkv slicing).
    x = jax.random.normal(k_x, (batch, seq, d_model), jnp.float32)
    out_self = jax.block_until_ready(mha(x, x, x))
    ref_self = reference_forward(mha, x, x, x)
    assert out_self.shape == (batch, seq, d_model)
    # bf16 MXU operands + approx softmax reciprocal -> relaxed tolerance.
    assert jnp.allclose(out_self, ref_self, atol=2e-2, rtol=2e-2), "self-attn mismatch"

    # Distinct q/k/v tensors (separate-projection path).
    query = jax.random.normal(k_q, (batch, seq, d_model), jnp.float32)
    key_in = jax.random.normal(k_k, (batch, seq, d_model), jnp.float32)
    value = jax.random.normal(k_v, (batch, seq, d_model), jnp.float32)
    out = jax.block_until_ready(mha(query, key_in, value))
    ref = reference_forward(mha, query, key_in, value)
    assert out.shape == (batch, seq, d_model)
    assert jnp.allclose(out, ref, atol=2e-2, rtol=2e-2), "cross-attn mismatch"

    print("KERNEL_OK")
</pallas_src>

<mosaic_0001>
module attributes {stable_mosaic.version = 11 : i64} {
  func.func @_linear_kernel(%arg0: i32, %arg1: i32, %arg2: memref<64x128xf32, #tpu.memory_space<vmem>>, %arg3: memref<128x384xf32, #tpu.memory_space<vmem>>, %arg4: memref<1x384xf32, #tpu.memory_space<vmem>>, %arg5: memref<64x384xf32, #tpu.memory_space<vmem>>) attributes {dimension_semantics = [#tpu.dimension_semantics<parallel>, #tpu.dimension_semantics<parallel>], iteration_bounds = array<i64: 1, 1>, scalar_prefetch = 0 : i64, scratch_operands = 0 : i64, tpu.core_type = #tpu.core_type<tc>, window_params = [{transform_indices = @transform_0, window_bounds = array<i64: 64, 128>}, {transform_indices = @transform_1, window_bounds = array<i64: 128, 384>}, {transform_indices = @transform_2, window_bounds = array<i64: 1, 384>}, {transform_indices = @transform_3, window_bounds = array<i64: 64, 384>}]} {
    %c0 = arith.constant 0 : index
    %c0_0 = arith.constant 0 : index
    %0 = vector.load %arg2[%c0, %c0_0] : memref<64x128xf32, #tpu.memory_space<vmem>>, vector<64x128xf32>
    %1 = arith.truncf %0 : vector<64x128xf32> to vector<64x128xbf16>
    %c0_1 = arith.constant 0 : index
    %c0_2 = arith.constant 0 : index
    %2 = vector.load %arg3[%c0_1, %c0_2] : memref<128x384xf32, #tpu.memory_space<vmem>>, vector<128x384xf32>
    %3 = arith.truncf %2 : vector<128x384xf32> to vector<128x384xbf16>
    %cst = arith.constant dense<0.000000e+00> : vector<64x384xf32>
    %4 = tpu.matmul %1, %3, %cst {dimension_numbers = #tpu.dot_dimension_numbers<[1], [0], [0], [1], [0, 0, 1, 1], [], []>} : vector<64x128xbf16>, vector<128x384xbf16>, vector<64x384xf32> -> vector<64x384xf32>
    %c0_3 = arith.constant 0 : index
    %c0_4 = arith.constant 0 : index
    %5 = vector.load %arg4[%c0_3, %c0_4] : memref<1x384xf32, #tpu.memory_space<vmem>>, vector<1x384xf32>
    %6 = vector.broadcast %5 : vector<1x384xf32> to vector<64x384xf32>
    %7 = arith.addf %4, %6 : vector<64x384xf32>
    %c0_5 = arith.constant 0 : index
    %c0_6 = arith.constant 0 : index
    %8 = vector.load %arg5[%c0_5, %c0_6] : memref<64x384xf32, #tpu.memory_space<vmem>>, vector<64x384xf32>
    tpu.vector_store %arg5[%c0_5, %c0_6], %7 {strides = array<i32>} : memref<64x384xf32, #tpu.memory_space<vmem>>, vector<64x384xf32>,
    return
  }
  func.func @transform_0(%arg0: i32, %arg1: i32) -> (i32, i32) {
    %c0_i32 = arith.constant 0 : i32
    %c0_i32_0 = arith.constant 0 : i32
    return %arg0, %c0_i32 : i32, i32
  }
  func.func @transform_1(%arg0: i32, %arg1: i32) -> (i32, i32) {
    %c0_i32 = arith.constant 0 : i32
    %c0_i32_0 = arith.constant 0 : i32
    return %c0_i32, %arg1 : i32, i32
  }
  func.func @transform_2(%arg0: i32, %arg1: i32) -> (i32, i32) {
    %c0_i32 = arith.constant 0 : i32
    %c0_i32_0 = arith.constant 0 : i32
    return %c0_i32, %arg1 : i32, i32
  }
  func.func @transform_3(%arg0: i32, %arg1: i32) -> (i32, i32) {
    %c0_i32 = arith.constant 0 : i32
    return %arg0, %arg1 : i32, i32
  }
}

</mosaic_0001>

<llo_original>
// kernel: tpu_custom_call.1
$region0: #{tpu_custom_call.1}
  #allocation0 [shape = 'u32[]', space=smem, size = 0x4, offset = 0x4, fixed_abs, tag = 'smem constant byte address 0x4 - core index']
  #allocation1 [shape = 'u32[144,128]{1,0:T(1,128)}', space=vmem, size = 0x12000, scoped, tag = 'internal scratch']
  %s0 = inlined_call_operand.hbm [shape: f32[64,128], index: 0, kind: input, shape index: {}]
  %s1 = inlined_call_operand.hbm [shape: f32[128,384], index: 1, kind: input, shape index: {}]
  %s2 = inlined_call_operand.vmem [shape: f32[1,384], index: 2, kind: input, shape index: {}]
  %s3 = inlined_call_operand.hbm [shape: f32[64,384], index: 3, kind: output, shape index: {}]
  %s4 = sld [smem:[#allocation0]]
  $region30: #{tpu_custom_call.1} parent=0
    _
  %s6 = ssub.s32 1, %s4
  %s7 = scalar_select 0, %s6, %s4
  $region1: #{tpu_custom_call.1} parent=0
    #allocation2 [shape = 'u8[32768]{0}', space=vmem, size = 0x8000, scoped, tag = 'input window, operand 0, single buffered']
    #allocation3 [shape = 's32[1]{0}', space=sflag, size = 0x4, scoped, tag = 'scoped memory for tpu_custom_call.1']
    #allocation4 [shape = 's32[1]{0}', space=sflag, size = 0x4, scoped, tag = 'scoped memory for tpu_custom_call.1']
    #allocation5 [shape = 'u8[196608]{0}', space=vmem, size = 0x30000, scoped, tag = 'input window, operand 1, single buffered']
    #allocation6 [shape = 's32[1]{0}', space=sflag, size = 0x4, scoped, tag = 'scoped memory for tpu_custom_call.1']
    #allocation7 [shape = 'u8[98304]{0}', space=vmem, size = 0x18000, scoped, tag = 'output window, operand 0, single buffered']
    %8 = vsyncpa [#allocation3], 0
    %9 = vsyncpa [#allocation6], 0
    %10 = vsyncpa [#allocation4], 0
    // Predicated region
    $region2: #{tpu_custom_call.1} parent=1 // pred_check
      _
    $region3: #{tpu_custom_call.1} parent=1 // pred_check_branch
      %12 = sbr.rel (0) target = $region5
    $region4: #{tpu_custom_call.1} parent=1 // pred_region
      %s14 = ssub.s32 1024, 1024
      %15 = vsyncadd [#allocation3], %s14
      %s16 = sshll.u32 [#allocation2], 4
      %s17 = int_to_ptr.vmem [resolvable:$true] %s16
      %22 = dma.hbm_to_vmem [thread:$0]  %s0, 1024, %s17, [#allocation3], 128, 128, 8
    $region5: #{tpu_custom_call.1} parent=1 // pred_fallthru
      _
    // Predicated region
    $region6: #{tpu_custom_call.1} parent=1 // pred_check
      _
    $region7: #{tpu_custom_call.1} parent=1 // pred_check_branch
      %24 = sbr.rel (0) target = $region9
    $region8: #{tpu_custom_call.1} parent=1 // pred_region
      %s26 = ssub.s32 6144, 6144
      %27 = vsyncadd [#allocation6], %s26
      %s28 = sshll.u32 [#allocation5], 4
      %s29 = int_to_ptr.vmem [resolvable:$true] %s28
      %34 = dma.hbm_to_vmem [thread:$0]  %s1, 6144, %s29, [#allocation6], 384, 384, 24
    $region9: #{tpu_custom_call.1} parent=1 // pred_fallthru
      _
    // Predicated region
    $region10: #{tpu_custom_call.1} parent=1 // pred_check
      _
    $region11: #{tpu_custom_call.1} parent=1 // pred_check_branch
      %36 = sbr.rel (0) target = $region13
    $region12: #{tpu_custom_call.1} parent=1 // pred_region
      _
    $region13: #{tpu_custom_call.1} parent=1 // pred_fallthru
      _
    // Predicated region
    $region14: #{tpu_custom_call.1} parent=1 // pred_check
      _
    $region15: #{tpu_custom_call.1} parent=1 // pred_check_branch
      %38 = sbr.rel (0) target = $region17
    $region16: #{tpu_custom_call.1} parent=1 // pred_region
      %39 = dma.done [#allocation3], 1024
    $region17: #{tpu_custom_call.1} parent=1 // pred_fallthru
      _
    // Predicated region
    $region18: #{tpu_custom_call.1} parent=1 // pred_check
      _
    $region19: #{tpu_custom_call.1} parent=1 // pred_check_branch
      %41 = sbr.rel (0) target = $region21
    $region20: #{tpu_custom_call.1} parent=1 // pred_region
      %42 = dma.done [#allocation6], 6144
    $region21: #{tpu_custom_call.1} parent=1 // pred_fallthru
      _
    %v44 = vld [vmem:[#allocation2] sm:$0xff]
    %v45 = vld [vmem:[#allocation2 + $0x8] sm:$0xff]
    %v46 = vld [vmem:[#allocation2 + $0x10] sm:$0xff]
    %v47 = vld [vmem:[#allocation2 + $0x18] sm:$0xff]
    %v48 = vld [vmem:[#allocation2 + $0x20] sm:$0xff]
    %v49 = vld [vmem:[#allocation2 + $0x28] sm:$0xff]
    %v50 = vld [vmem:[#allocation2 + $0x30] sm:$0xff]
    %v51 = vld [vmem:[#allocation2 + $0x38] sm:$0xff]
    %v52 = vpack.c.bf16 %v45, %v44
    %v53 = vpack.c.bf16 %v47, %v46
    %v54 = vpack.c.bf16 %v49, %v48
    %v55 = vpack.c.bf16 %v51, %v50
    %v56 = vld [vmem:[#allocation5] sm:$0xff]
    %v57 = vld [vmem:[#allocation5 + $0x8] sm:$0xff]
    %v58 = vld [vmem:[#allocation5 + $0x10] sm:$0xff]
    %v59 = vld [vmem:[#allocation5 + $0x18] sm:$0xff]
    %v60 = vld [vmem:[#allocation5 + $0x20] sm:$0xff]
    %v61 = vld [vmem:[#allocation5 + $0x28] sm:$0xff]
    %v62 = vld [vmem:[#allocation5 + $0x30] sm:$0xff]
    %v63 = vld [vmem:[#allocation5 + $0x38] sm:$0xff]
    %v64 = vld [vmem:[#allocation5 + $0x40] sm:$0xff]
    %v65 = vld [vmem:[#allocation5 + $0x48] sm:$0xff]
    %v66 = vld [vmem:[#allocation5 + $0x50] sm:$0xff]
    %v67 = vld [vmem:[#allocation5 + $0x58] sm:$0xff]
    %v68 = vld [vmem:[#allocation5 + $0x60] sm:$0xff]
    %v69 = vld [vmem:[#allocation5 + $0x68] sm:$0xff]
    %v70 = vld [vmem:[#allocation5 + $0x70] sm:$0xff]
    %v71 = vld [vmem:[#allocation5 + $0x78] sm:$0xff]
    %v72 = vld [vmem:[#allocation5 + $0x80] sm:$0xff]
    %v73 = vld [vmem:[#allocation5 + $0x88] sm:$0xff]
    %v74 = vld [vmem:[#allocation5 + $0x90] sm:$0xff]
    %v75 = vld [vmem:[#allocation5 + $0x98] sm:$0xff]
    %v76 = vld [vmem:[#allocation5 + $0xa0] sm:$0xff]
    %v77 = vld [vmem:[#allocation5 + $0xa8] sm:$0xff]
    %v78 = vld [vmem:[#allocation5 + $0xb0] sm:$0xff]
    %v79 = vld [vmem:[#allocation5 + $0xb8] sm:$0xff]
    %v80 = vld [vmem:[#allocation5 + $0xc0] sm:$0xff]
    %v81 = vld [vmem:[#allocation5 + $0xc8] sm:$0xff]
    %v82 = vld [vmem:[#allocation5 + $0xd0] sm:$0xff]
    %v83 = vld [vmem:[#allocation5 + $0xd8] sm:$0xff]
    %v84 = vld [vmem:[#allocation5 + $0xe0] sm:$0xff]
    %v85 = vld [vmem:[#allocation5 + $0xe8] sm:$0xff]
    %v86 = vld [vmem:[#allocation5 + $0xf0] sm:$0xff]
    %v87 = vld [vmem:[#allocation5 + $0xf8] sm:$0xff]
    %v88 = vld [vmem:[#allocation5 + $0x100] sm:$0xff]
    %v89 = vld [vmem:[#allocation5 + $0x108] sm:$0xff]
    %v90 = vld [vmem:[#allocation5 + $0x110] sm:$0xff]
    %v91 = vld [vmem:[#allocation5 + $0x118] sm:$0xff]
    %v92 = vld [vmem:[#allocation5 + $0x120] sm:$0xff]
    %v93 = vld [vmem:[#allocation5 + $0x128] sm:$0xff]
    %v94 = vld [vmem:[#allocation5 + $0x130] sm:$0xff]
    %v95 = vld [vmem:[#allocation5 + $0x138] sm:$0xff]
    %v96 = vld [vmem:[#allocation5 + $0x140] sm:$0xff]
    %v97 = vld [vmem:[#allocation5 + $0x148] sm:$0xff]
    %v98 = vld [vmem:[#allocation5 + $0x150] sm:$0xff]
    %v99 = vld [vmem:[#allocation5 + $0x158] sm:$0xff]
    %v100 = vld [vmem:[#allocation5 + $0x160] sm:$0xff]
    %v101 = vld [vmem:[#allocation5 + $0x168] sm:$0xff]
    %v102 = vld [vmem:[#allocation5 + $0x170] sm:$0xff]
    %v103 = vld [vmem:[#allocation5 + $0x178] sm:$0xff]
    %v104 = vpack.c.bf16 %v59, %v56
    %v105 = vpack.c.bf16 %v60, %v57
    %v106 = vpack.c.bf16 %v61, %v58
    %v107 = vpack.c.bf16 %v65, %v62
    %v108 = vpack.c.bf16 %v66, %v63
    %v109 = vpack.c.bf16 %v67, %v64
    %v110 = vpack.c.bf16 %v71, %v68
    %v111 = vpack.c.bf16 %v72, %v69
    %v112 = vpack.c.bf16 %v73, %v70
    %v113 = vpack.c.bf16 %v77, %v74
    %v114 = vpack.c.bf16 %v78, %v75
    %v115 = vpack.c.bf16 %v79, %v76
    %v116 = vpack.c.bf16 %v83, %v80
    %v117 = vpack.c.bf16 %v84, %v81
    %v118 = vpack.c.bf16 %v85, %v82
    %v119 = vpack.c.bf16 %v89, %v86
    %v120 = vpack.c.bf16 %v90, %v87
    %v121 = vpack.c.bf16 %v91, %v88
    %v122 = vpack.c.bf16 %v95, %v92
    %v123 = vpack.c.bf16 %v96, %v93
    %v124 = vpack.c.bf16 %v97, %v94
    %v125 = vpack.c.bf16 %v101, %v98
    %v126 = vpack.c.bf16 %v102, %v99
    %v127 = vpack.c.bf16 %v103, %v100
    %v128 = vld [vmem:[%s2] sm:$0x7]
    %v130 = vlaneseq
    %v131 = vshrl.u32 %v130, 7
    %v132 = vsub.s32 0, %v131
    %v133 = vrot.slane %v128, %v132
    %v134 = vlaneseq
    %v135 = vshrl.u32 %v134, 7
    %v136 = vsub.s32 1, %v135
    %v137 = vrot.slane %v128, %v136
    %v138 = vlaneseq
    %v139 = vshrl.u32 %v138, 7
    %v140 = vsub.s32 2, %v139
    %v141 = vrot.slane %v128, %v140
    %145 = vmatprep.subr.bf16.mxu0 %v105
    %146 = vmatpush1.bf16.msra.mxu0 %v104
    %147 = vmatprep.subr.bf16.mxu0 %v108
    %148 = vmatpush1.bf16.msra.mxu0 %v107
    %149 = vmatprep.subr.bf16.mxu0 %v111
    %150 = vmatpush1.bf16.msra.mxu0 %v110
    %151 = vmatprep.subr.bf16.mxu0 %v114
    %152 = vmatpush1.bf16.msra.mxu0 %v113
    %153 = vmatprep.subr.bf16.mxu0 %v117
    %154 = vmatpush1.bf16.msra.mxu0 %v116
    %155 = vmatprep.subr.bf16.mxu0 %v120
    %156 = vmatpush1.bf16.msra.mxu0 %v119
    %157 = vmatprep.subr.bf16.mxu0 %v123
    %158 = vmatpush1.bf16.msra.mxu0 %v122
    %159 = vmatprep.subr.bf16.mxu0 %v126
    %160 = vmatpush1.bf16.msra.mxu0 %v125
    %161 = vmatprep.subr.bf16.mxu0 0
    %162 = vmatpush1.bf16.msra.mxu0 0
    %163 = vmatprep.subr.bf16.mxu0 0
    %164 = vmatpush1.bf16.msra.mxu0 0
    %165 = vmatprep.subr.bf16.mxu0 0
    %166 = vmatpush1.bf16.msra.mxu0 0
    %167 = vmatprep.subr.bf16.mxu0 0
    %168 = vmatpush1.bf16.msra.mxu0 0
    %169 = vmatprep.subr.bf16.mxu0 0
    %170 = vmatpush1.bf16.msra.mxu0 0
    %171 = vmatprep.subr.bf16.mxu0 0
    %172 = vmatpush1.bf16.msra.mxu0 0
    %173 = vmatprep.subr.bf16.mxu0 0
    %174 = vmatpush1.bf16.msra.mxu0 0
    %175 = vmatprep.subr.bf16.mxu0 0
    %176 = vmatpush1.bf16.msra.mxu0 0
    %177 = vmatprep.mubr.bf16.mxu0 0
    %178 = vmatmul.mubr.bf16.gmra.mrb[0].mxu0 %v52
    %v179 = vpop.f32.mrb[0].mxu0
    %v180 = vadd.f32 %v133, %v179
    %v181 = vpop.f32.mrb[0].mxu0
    %v182 = vadd.f32 %v137, %v181
    %v183 = vpop.f32.mrb[0].mxu0
    %v184 = vadd.f32 %v133, %v183
    %v185 = vpop.f32.mrb[0].mxu0
    %v186 = vadd.f32 %v137, %v185
    %187 = vmatprep.mubr.bf16.mxu0 0
    %188 = vmatmul.mubr.bf16.gmra.mrb[0].mxu0 %v53
    %v189 = vpop.f32.mrb[0].mxu0
    %v190 = vadd.f32 %v133, %v189
    %v191 = vpop.f32.mrb[0].mxu0
    %v192 = vadd.f32 %v137, %v191
    %v193 = vpop.f32.mrb[0].mxu0
    %v194 = vadd.f32 %v133, %v193
    %v195 = vpop.f32.mrb[0].mxu0
    %v196 = vadd.f32 %v137, %v195
    %197 = vmatprep.mubr.bf16.mxu0 0
    %198 = vmatmul.mubr.bf16.gmra.mrb[0].mxu0 %v54
    %v199 = vpop.f32.mrb[0].mxu0
    %v200 = vadd.f32 %v133, %v199
    %v201 = vpop.f32.mrb[0].mxu0
    %v202 = vadd.f32 %v137, %v201
    %v203 = vpop.f32.mrb[0].mxu0
    %v204 = vadd.f32 %v133, %v203
    %v205 = vpop.f32.mrb[0].mxu0
    %v206 = vadd.f32 %v137, %v205
    %207 = vmatprep.mubr.bf16.mxu0 0
    %208 = vmatmul.mubr.bf16.gmra.mrb[0].mxu0 %v55
    %v209 = vpop.f32.mrb[0].mxu0
    %v210 = vadd.f32 %v133, %v209
    %v211 = vpop.f32.mrb[0].mxu0
    %v212 = vadd.f32 %v137, %v211
    %v213 = vpop.f32.mrb[0].mxu0
    %v214 = vadd.f32 %v133, %v213
    %v215 = vpop.f32.mrb[0].mxu0
    %v216 = vadd.f32 %v137, %v215
    %217 = vdwg.mxu0
    %218 = vmatprep.subr.bf16.mxu0 0
    %219 = vmatpush1.bf16.msra.mxu0 %v106
    %220 = vmatprep.subr.bf16.mxu0 0
    %221 = vmatpush1.bf16.msra.mxu0 %v109
    %222 = vmatprep.subr.bf16.mxu0 0
    %223 = vmatpush1.bf16.msra.mxu0 %v112
    %224 = vmatprep.subr.bf16.mxu0 0
    %225 = vmatpush1.bf16.msra.mxu0 %v115
    %226 = vmatprep.subr.bf16.mxu0 0
    %227 = vmatpush1.bf16.msra.mxu0 %v118
    %228 = vmatprep.subr.bf16.mxu0 0
    %229 = vmatpush1.bf16.msra.mxu0 %v121
    %230 = vmatprep.subr.bf16.mxu0 0
    %231 = vmatpush1.bf16.msra.mxu0 %v124
    %232 = vmatprep.subr.bf16.mxu0 0
    %233 = vmatpush1.bf16.msra.mxu0 %v127
    %234 = vmatprep.subr.bf16.mxu0 0
    %235 = vmatpush1.bf16.msra.mxu0 0
    %236 = vmatprep.subr.bf16.mxu0 0
    %237 = vmatpush1.bf16.msra.mxu0 0
    %238 = vmatprep.subr.bf16.mxu0 0
    %239 = vmatpush1.bf16.msra.mxu0 0
    %240 = vmatprep.subr.bf16.mxu0 0
    %241 = vmatpush1.bf16.msra.mxu0 0
    %242 = vmatprep.subr.bf16.mxu0 0
    %243 = vmatpush1.bf16.msra.mxu0 0
    %244 = vmatprep.subr.bf16.mxu0 0
    %245 = vmatpush1.bf16.msra.mxu0 0
    %246 = vmatprep.subr.bf16.mxu0 0
    %247 = vmatpush1.bf16.msra.mxu0 0
    %248 = vmatprep.subr.bf16.mxu0 0
    %249 = vmatpush1.bf16.msra.mxu0 0
    %250 = vmatprep.mubr.bf16.mxu0 0
    %251 = vmatmul.mubr.bf16.gmra.mrb[0].mxu0 %v52
    %v252 = vpop.f32.mrb[0].mxu0
    %v253 = vadd.f32 %v141, %v252
    %v254 = vpop.f32.mrb[0].mxu0
    %v255 = vpop.f32.mrb[0].mxu0
    %v256 = vadd.f32 %v141, %v255
    %v257 = vpop.f32.mrb[0].mxu0
    %258 = vmatprep.mubr.bf16.mxu0 0
    %259 = vmatmul.mubr.bf16.gmra.mrb[0].mxu0 %v53
    %v260 = vpop.f32.mrb[0].mxu0
    %v261 = vadd.f32 %v141, %v260
    %v262 = vpop.f32.mrb[0].mxu0
    %v263 = vpop.f32.mrb[0].mxu0
    %v264 = vadd.f32 %v141, %v263
    %v265 = vpop.f32.mrb[0].mxu0
    %266 = vmatprep.mubr.bf16.mxu0 0
    %267 = vmatmul.mubr.bf16.gmra.mrb[0].mxu0 %v54
    %v268 = vpop.f32.mrb[0].mxu0
    %v269 = vadd.f32 %v141, %v268
    %v270 = vpop.f32.mrb[0].mxu0
    %v271 = vpop.f32.mrb[0].mxu0
    %v272 = vadd.f32 %v141, %v271
    %v273 = vpop.f32.mrb[0].mxu0
    %274 = vmatprep.mubr.bf16.mxu0 0
    %275 = vmatmul.mubr.bf16.gmra.mrb[0].mxu0 %v55
    %v276 = vpop.f32.mrb[0].mxu0
    %v277 = vadd.f32 %v141, %v276
    %v278 = vpop.f32.mrb[0].mxu0
    %v279 = vpop.f32.mrb[0].mxu0
    %v280 = vadd.f32 %v141, %v279
    %v281 = vpop.f32.mrb[0].mxu0
    %282 = vdwg.mxu0
    %283 = vst [vmem:[#allocation7] sm:$0xff] %v180
    %284 = vst [vmem:[#allocation7 + $0x8] sm:$0xff] %v182
    %285 = vst [vmem:[#allocation7 + $0x10] sm:$0xff] %v253
    %286 = vst [vmem:[#allocation7 + $0x18] sm:$0xff] %v184
    %287 = vst [vmem:[#allocation7 + $0x20] sm:$0xff] %v186
    %288 = vst [vmem:[#allocation7 + $0x28] sm:$0xff] %v256
    %289 = vst [vmem:[#allocation7 + $0x30] sm:$0xff] %v190
    %290 = vst [vmem:[#allocation7 + $0x38] sm:$0xff] %v192
    %291 = vst [vmem:[#allocation7 + $0x40] sm:$0xff] %v261
    %292 = vst [vmem:[#allocation7 + $0x48] sm:$0xff] %v194
    %293 = vst [vmem:[#allocation7 + $0x50] sm:$0xff] %v196
    %294 = vst [vmem:[#allocation7 + $0x58] sm:$0xff] %v264
    %295 = vst [vmem:[#allocation7 + $0x60] sm:$0xff] %v200
    %296 = vst [vmem:[#allocation7 + $0x68] sm:$0xff] %v202
    %297 = vst [vmem:[#allocation7 + $0x70] sm:$0xff] %v269
    %298 = vst [vmem:[#allocation7 + $0x78] sm:$0xff] %v204
    %299 = vst [vmem:[#allocation7 + $0x80] sm:$0xff] %v206
    %300 = vst [vmem:[#allocation7 + $0x88] sm:$0xff] %v272
    %301 = vst [vmem:[#allocation7 + $0x90] sm:$0xff] %v210
    %302 = vst [vmem:[#allocation7 + $0x98] sm:$0xff] %v212
    %303 = vst [vmem:[#allocation7 + $0xa0] sm:$0xff] %v277
    %304 = vst [vmem:[#allocation7 + $0xa8] sm:$0xff] %v214
    %305 = vst [vmem:[#allocation7 + $0xb0] sm:$0xff] %v216
    %306 = vst [vmem:[#allocation7 + $0xb8] sm:$0xff] %v280
    // Predicated region
    $region22: #{tpu_custom_call.1} parent=1 // pred_check
      _
    $region23: #{tpu_custom_call.1} parent=1 // pred_check_branch
      %308 = sbr.rel (0) target = $region25
    $region24: #{tpu_custom_call.1} parent=1 // pred_region
      %s310 = ssub.s32 3072, 3072
      %311 = vsyncadd [#allocation4], %s310
      %s312 = sshll.u32 [#allocation7], 4
      %s313 = int_to_ptr.vmem [resolvable:$true] %s312
      %318 = dma.vmem_to_hbm [thread:$0]  %s313, 3072, %s3, [#allocation4], 384, 384, 24
    $region25: #{tpu_custom_call.1} parent=1 // pred_fallthru
      _
    // Predicated region
    $region26: #{tpu_custom_call.1} parent=1 // pred_check
      _
    $region27: #{tpu_custom_call.1} parent=1 // pred_check_branch
      %320 = sbr.rel (0) target = $region29
    $region28: #{tpu_custom_call.1} parent=1 // pred_region
      %321 = dma.done [#allocation4], 3072
    $region29: #{tpu_custom_call.1} parent=1 // pred_fallthru
      _
    %322 = vsyncpa [#allocation3], 1
    %323 = vsyncpa [#allocation6], 1
    %324 = vsyncpa [#allocation4], 1

</llo_original>
